<compile_context>
chip_gen: v7x
topology: tpu7x:2x2x1
jax: 0.10.0
libtpu: 0.0.40
codegen_flags: <defaults>
</compile_context>

<pallas_src>
import functools

import jax
import jax.numpy as jnp
from jax.experimental import pallas as pl
from jax.experimental.pallas import tpu as pltpu

_EPS = 1e-5          # nn.InstanceNorm2d default eps
_SLOPE = 0.2         # LeakyReLU negative_slope (StyleGAN default)


def _epilogue_kernel(x_ref, noise_ref, nw_ref, ss_ref, sb_ref, o_ref):
    # x_ref:     (1, CT, HW)   activation tile (channels x flattened spatial)
    # noise_ref: (1, 1,  HW)   per-pixel noise (shared across channels)
    # nw_ref:    (CT, 1)       per-channel noise weight
    # ss_ref:    (1, CT, 1)    style scale  (style[:, 0])
    # sb_ref:    (1, CT, 1)    style bias   (style[:, 1])
    # o_ref:     (1, CT, HW)
    x = x_ref[0].astype(jnp.float32)          # single upcast of the big tile
    noise = noise_ref[0].astype(jnp.float32)  # (1, HW), broadcasts over CT
    nw = nw_ref[...].astype(jnp.float32)      # (CT, 1)

    # 1. NoiseLayer
    t = x + nw * noise
    # 2. LeakyReLU(0.2)
    t = jnp.where(t >= 0.0, t, _SLOPE * t)
    # 3. InstanceNorm2d over the spatial (lane) axis, biased variance
    mean = jnp.mean(t, axis=-1, keepdims=True)        # (CT, 1)
    d = t - mean
    var = jnp.mean(d * d, axis=-1, keepdims=True)     # (CT, 1)
    inv = jax.lax.rsqrt(var + _EPS)                   # EUP, effectively free
    # 4. StyleMod: fold (scale + 1) * inv into one per-channel multiplier
    scale = ss_ref[0].astype(jnp.float32)             # (CT, 1)
    bias = sb_ref[0].astype(jnp.float32)              # (CT, 1)
    g = (scale + 1.0) * inv
    o_ref[0] = (g * d + bias).astype(o_ref.dtype)


def _choose_c_tile(C, HW, itemsize, max_block_bytes=4 * 1024 * 1024):
    """Largest channel tile whose (CT, HW) block fits the budget.

    Keeps CT either == C (full, satisfies the (8,128) exception) or a
    multiple of 8 that divides C.
    """
    if C * HW * itemsize <= max_block_bytes:
        return C
    cands = [ct for ct in range(8, C, 8)
             if C % ct == 0 and ct * HW * itemsize <= max_block_bytes]
    return max(cands) if cands else C


@functools.partial(jax.jit, static_argnames=())
def _epilogue_pallas(x3, noise3, nw2, ss3, sb3):
    N, C, HW = x3.shape
    c_tile = _choose_c_tile(C, HW, x3.dtype.itemsize)
    grid = (N, C // c_tile)

    return pl.pallas_call(
        _epilogue_kernel,
        out_shape=jax.ShapeDtypeStruct((N, C, HW), x3.dtype),
        grid_spec=pltpu.PrefetchScalarGridSpec(
            num_scalar_prefetch=0,
            grid=grid,
            in_specs=[
                pl.BlockSpec((1, c_tile, HW), lambda n, c: (n, c, 0)),  # x
                pl.BlockSpec((1, 1, HW), lambda n, c: (n, 0, 0)),       # noise
                pl.BlockSpec((c_tile, 1), lambda n, c: (c, 0)),         # noise_w
                pl.BlockSpec((1, c_tile, 1), lambda n, c: (n, c, 0)),   # style scale
                pl.BlockSpec((1, c_tile, 1), lambda n, c: (n, c, 0)),   # style bias
            ],
            out_specs=pl.BlockSpec((1, c_tile, HW), lambda n, c: (n, c, 0)),
        ),
        compiler_params=pltpu.CompilerParams(
            dimension_semantics=("parallel", "parallel"),
            vmem_limit_bytes=32 * 1024 * 1024,
        ),
    )(x3, noise3, nw2, ss3, sb3)


def layer_epilogue(x, dlatent, noise, noise_weight, style_weight, style_bias,
                   *, w_mul=1.0, b_mul=1.0):
    """StyleGAN LayerEpilogue forward.

    x:            (N, C, H, W)   activations (NCHW, as in PyTorch)
    dlatent:      (N, D)         latent slice for StyleMod
    noise:        (N, 1, H, W)   per-pixel noise (explicit, deterministic)
    noise_weight: (C,)           NoiseLayer per-channel weight
    style_weight: (2C, D), style_bias: (2C,)  MyLinear params of StyleMod
    """
    N, C, H, W = x.shape
    HW = H * W

    # --- tiny style Linear (MyLinear with equalized LR), plain-JAX glue ---
    style = (dlatent.astype(jnp.float32)
             @ (style_weight.astype(jnp.float32) * w_mul).T
             + style_bias.astype(jnp.float32) * b_mul)      # (N, 2C)
    style_scale = style[:, :C]                               # style[:, 0]
    style_shift = style[:, C:]                               # style[:, 1]

    # --- free reshapes: put the long spatial axis on the lane dimension ---
    x3 = x.reshape(N, C, HW)
    noise3 = noise.reshape(N, 1, HW)
    nw2 = noise_weight.reshape(C, 1)
    ss3 = style_scale.reshape(N, C, 1)
    sb3 = style_shift.reshape(N, C, 1)

    out = _epilogue_pallas(x3, noise3, nw2, ss3, sb3)
    return out.reshape(N, C, H, W)


def _reference_epilogue(x, dlatent, noise, noise_weight, style_weight,
                        style_bias, w_mul, b_mul):
    """Pure-JAX reference matching the PyTorch module."""
    xf = x.astype(jnp.float32)
    nf = noise.astype(jnp.float32)
    # NoiseLayer
    t = xf + noise_weight.astype(jnp.float32)[None, :, None, None] * nf
    # LeakyReLU(0.2)
    t = jnp.where(t >= 0.0, t, _SLOPE * t)
    # InstanceNorm2d (affine=False, biased var)
    mean = jnp.mean(t, axis=(2, 3), keepdims=True)
    var = jnp.mean((t - mean) ** 2, axis=(2, 3), keepdims=True)
    t = (t - mean) / jnp.sqrt(var + _EPS)
    # StyleMod
    style = (dlatent.astype(jnp.float32)
             @ (style_weight.astype(jnp.float32) * w_mul).T
             + style_bias.astype(jnp.float32) * b_mul)
    C = x.shape[1]
    scale = style[:, :C][:, :, None, None]
    shift = style[:, C:][:, :, None, None]
    return (t * (scale + 1.0) + shift).astype(x.dtype)


if __name__ == "__main__":
    key = jax.random.PRNGKey(0)
    N, C, H, W, D = 2, 4, 16, 16, 32
    k1, k2, k3, k4, k5, k6 = jax.random.split(key, 6)

    x = jax.random.normal(k1, (N, C, H, W), dtype=jnp.float32)
    noise = jax.random.normal(k2, (N, 1, H, W), dtype=jnp.float32)
    dlatent = jax.random.normal(k3, (N, D), dtype=jnp.float32)
    noise_weight = 0.1 * jax.random.normal(k4, (C,), dtype=jnp.float32)
    style_weight = jax.random.normal(k5, (2 * C, D), dtype=jnp.float32)
    style_bias = 0.1 * jax.random.normal(k6, (2 * C,), dtype=jnp.float32)
    w_mul = 1.0 / (D ** 0.5)   # MyLinear(use_wscale=True, gain=1.0, lrmul=1)
    b_mul = 1.0

    y = layer_epilogue(x, dlatent, noise, noise_weight, style_weight,
                       style_bias, w_mul=w_mul, b_mul=b_mul)
    jax.block_until_ready(y)

    y_ref = _reference_epilogue(x, dlatent, noise, noise_weight, style_weight,
                                style_bias, w_mul, b_mul)
    assert y.shape == (N, C, H, W)
    assert jnp.allclose(y, y_ref, atol=2e-4, rtol=2e-4), "mismatch vs reference"

    print("KERNEL_OK")
</pallas_src>

<mosaic_0001>
module attributes {stable_mosaic.version = 11 : i64} {
  func.func @_epilogue_kernel(%arg0: i32, %arg1: i32, %arg2: memref<1x4x256xf32, #tpu.memory_space<vmem>>, %arg3: memref<1x1x256xf32, #tpu.memory_space<vmem>>, %arg4: memref<4x1xf32, #tpu.memory_space<vmem>>, %arg5: memref<1x4x1xf32, #tpu.memory_space<vmem>>, %arg6: memref<1x4x1xf32, #tpu.memory_space<vmem>>, %arg7: memref<1x4x256xf32, #tpu.memory_space<vmem>>) attributes {dimension_semantics = [#tpu.dimension_semantics<parallel>, #tpu.dimension_semantics<parallel>], iteration_bounds = array<i64: 2, 1>, scalar_prefetch = 0 : i64, scratch_operands = 0 : i64, tpu.core_type = #tpu.core_type<tc>, window_params = [{transform_indices = @transform_0, window_bounds = array<i64: 1, 4, 256>}, {transform_indices = @transform_1, window_bounds = array<i64: 1, 1, 256>}, {transform_indices = @transform_2, window_bounds = array<i64: 4, 1>}, {transform_indices = @transform_3, window_bounds = array<i64: 1, 4, 1>}, {transform_indices = @transform_4, window_bounds = array<i64: 1, 4, 1>}, {transform_indices = @transform_5, window_bounds = array<i64: 1, 4, 256>}]} {
    %c0 = arith.constant 0 : index
    %c0_0 = arith.constant 0 : index
    %c0_1 = arith.constant 0 : index
    %0 = vector.load %arg2[%c0, %c0_0, %c0_1] : memref<1x4x256xf32, #tpu.memory_space<vmem>>, vector<1x4x256xf32>
    %1 = vector.shape_cast %0 : vector<1x4x256xf32> to vector<4x256xf32>
    %c0_2 = arith.constant 0 : index
    %c0_3 = arith.constant 0 : index
    %c0_4 = arith.constant 0 : index
    %2 = vector.load %arg3[%c0_2, %c0_3, %c0_4] : memref<1x1x256xf32, #tpu.memory_space<vmem>>, vector<1x1x256xf32>
    %3 = vector.shape_cast %2 : vector<1x1x256xf32> to vector<1x256xf32>
    %c0_5 = arith.constant 0 : index
    %c0_6 = arith.constant 0 : index
    %4 = vector.load %arg4[%c0_5, %c0_6] : memref<4x1xf32, #tpu.memory_space<vmem>>, vector<4x1xf32>
    %5 = vector.broadcast %4 : vector<4x1xf32> to vector<4x256xf32>
    %6 = vector.broadcast %3 : vector<1x256xf32> to vector<4x256xf32>
    %7 = arith.mulf %5, %6 : vector<4x256xf32>
    %8 = arith.addf %1, %7 : vector<4x256xf32>
    %cst = arith.constant 0.000000e+00 : f32
    %9 = vector.broadcast %cst : f32 to vector<4x256xf32>
    %10 = arith.cmpf oge, %8, %9 : vector<4x256xf32>
    %cst_7 = arith.constant 2.000000e-01 : f32
    %11 = vector.broadcast %cst_7 : f32 to vector<4x256xf32>
    %12 = arith.mulf %11, %8 : vector<4x256xf32>
    %13 = arith.select %10, %8, %12 : vector<4x256xi1>, vector<4x256xf32>
    %cst_8 = arith.constant dense<0.000000e+00> : vector<4xf32>
    %14 = vector.multi_reduction <add>, %13, %cst_8 [1] : vector<4x256xf32> to vector<4xf32>
    %15 = vector.shape_cast %14 : vector<4xf32> to vector<4x1xf32>
    %cst_9 = arith.constant 2.560000e+02 : f32
    %16 = vector.broadcast %cst_9 : f32 to vector<4x1xf32>
    %17 = arith.divf %15, %16 : vector<4x1xf32>
    %18 = vector.broadcast %17 : vector<4x1xf32> to vector<4x256xf32>
    %19 = arith.subf %13, %18 : vector<4x256xf32>
    %20 = arith.mulf %19, %19 : vector<4x256xf32>
    %cst_10 = arith.constant dense<0.000000e+00> : vector<4xf32>
    %21 = vector.multi_reduction <add>, %20, %cst_10 [1] : vector<4x256xf32> to vector<4xf32>
    %22 = vector.shape_cast %21 : vector<4xf32> to vector<4x1xf32>
    %cst_11 = arith.constant 2.560000e+02 : f32
    %23 = vector.broadcast %cst_11 : f32 to vector<4x1xf32>
    %24 = arith.divf %22, %23 : vector<4x1xf32>
    %cst_12 = arith.constant 9.99999974E-6 : f32
    %25 = vector.broadcast %cst_12 : f32 to vector<4x1xf32>
    %26 = arith.addf %24, %25 : vector<4x1xf32>
    %27 = math.rsqrt %26 : vector<4x1xf32>
    %c0_13 = arith.constant 0 : index
    %c0_14 = arith.constant 0 : index
    %c0_15 = arith.constant 0 : index
    %28 = vector.load %arg5[%c0_13, %c0_14, %c0_15] : memref<1x4x1xf32, #tpu.memory_space<vmem>>, vector<1x4x1xf32>
    %29 = vector.shape_cast %28 : vector<1x4x1xf32> to vector<4x1xf32>
    %c0_16 = arith.constant 0 : index
    %c0_17 = arith.constant 0 : index
    %c0_18 = arith.constant 0 : index
    %30 = vector.load %arg6[%c0_16, %c0_17, %c0_18] : memref<1x4x1xf32, #tpu.memory_space<vmem>>, vector<1x4x1xf32>
    %31 = vector.shape_cast %30 : vector<1x4x1xf32> to vector<4x1xf32>
    %cst_19 = arith.constant 1.000000e+00 : f32
    %32 = vector.broadcast %cst_19 : f32 to vector<4x1xf32>
    %33 = arith.addf %29, %32 : vector<4x1xf32>
    %34 = arith.mulf %33, %27 : vector<4x1xf32>
    %35 = vector.broadcast %34 : vector<4x1xf32> to vector<4x256xf32>
    %36 = arith.mulf %35, %19 : vector<4x256xf32>
    %37 = vector.broadcast %31 : vector<4x1xf32> to vector<4x256xf32>
    %38 = arith.addf %36, %37 : vector<4x256xf32>
    %c0_20 = arith.constant 0 : index
    %c0_21 = arith.constant 0 : index
    %c0_22 = arith.constant 0 : index
    %39 = vector.load %arg7[%c0_20, %c0_21, %c0_22] : memref<1x4x256xf32, #tpu.memory_space<vmem>>, vector<1x4x256xf32>
    %40 = vector.shape_cast %39 : vector<1x4x256xf32> to vector<4x256xf32>
    %41 = vector.shape_cast %38 : vector<4x256xf32> to vector<1x4x256xf32>
    tpu.vector_store %arg7[%c0_20, %c0_21, %c0_22], %41 {strides = array<i32>} : memref<1x4x256xf32, #tpu.memory_space<vmem>>, vector<1x4x256xf32>,
    return
  }
  func.func @transform_0(%arg0: i32, %arg1: i32) -> (i32, i32, i32) {
    %c0_i32 = arith.constant 0 : i32
    %c0_i32_0 = arith.constant 0 : i32
    return %arg0, %arg1, %c0_i32 : i32, i32, i32
  }
  func.func @transform_1(%arg0: i32, %arg1: i32) -> (i32, i32, i32) {
    %c0_i32 = arith.constant 0 : i32
    %c0_i32_0 = arith.constant 0 : i32
    %c0_i32_1 = arith.constant 0 : i32
    return %arg0, %c0_i32, %c0_i32_0 : i32, i32, i32
  }
  func.func @transform_2(%arg0: i32, %arg1: i32) -> (i32, i32) {
    %c0_i32 = arith.constant 0 : i32
    %c0_i32_0 = arith.constant 0 : i32
    return %arg1, %c0_i32 : i32, i32
  }
  func.func @transform_3(%arg0: i32, %arg1: i32) -> (i32, i32, i32) {
    %c0_i32 = arith.constant 0 : i32
    %c0_i32_0 = arith.constant 0 : i32
    return %arg0, %arg1, %c0_i32 : i32, i32, i32
  }
  func.func @transform_4(%arg0: i32, %arg1: i32) -> (i32, i32, i32) {
    %c0_i32 = arith.constant 0 : i32
    %c0_i32_0 = arith.constant 0 : i32
    return %arg0, %arg1, %c0_i32 : i32, i32, i32
  }
  func.func @transform_5(%arg0: i32, %arg1: i32) -> (i32, i32, i32) {
    %c0_i32 = arith.constant 0 : i32
    %c0_i32_0 = arith.constant 0 : i32
    return %arg0, %arg1, %c0_i32 : i32, i32, i32
  }
}

</mosaic_0001>

<llo_original>
// kernel: _epilogue_pallas.1
$region0: #{_epilogue_pallas.1}
  #allocation0 [shape = 'u32[]', space=smem, size = 0x4, offset = 0x4, fixed_abs, tag = 'smem constant byte address 0x4 - core index']
  #allocation1 [shape = 'u32[144,128]{1,0:T(1,128)}', space=vmem, size = 0x12000, scoped, tag = 'internal scratch']
  %s0 = inlined_call_operand.vmem [shape: f32[2,4,256], index: 0, kind: input, shape index: {}]
  %s1 = inlined_call_operand.vmem [shape: f32[2,1,256], index: 1, kind: input, shape index: {}]
  %s2 = inlined_call_operand.vmem [shape: f32[4,1], index: 2, kind: input, shape index: {}]
  %s3 = inlined_call_operand.vmem [shape: f32[2,4,1], index: 3, kind: input, shape index: {}]
  %s4 = inlined_call_operand.vmem [shape: f32[2,4,1], index: 4, kind: input, shape index: {}]
  %s5 = inlined_call_operand.hbm [shape: f32[2,4,256], index: 5, kind: output, shape index: {}]
  %s6 = sld [smem:[#allocation0]]
  $region53: #{_epilogue_pallas.1} parent=0
    _
  %s8 = ssub.s32 1, %s6
  %s9 = scalar_select 0, %s8, %s6
  $region1: #{_epilogue_pallas.1} parent=0
    #allocation2 [shape = 'u8[8192]{0}', space=vmem, size = 0x2000, scoped, tag = 'output window, operand 0']
    #allocation3 [shape = 's32[2]{0}', space=sflag, size = 0x8, scoped, tag = 'scoped memory for _epilogue_pallas.1']
    %10 = vsyncpa [#allocation3], 0
    %s11 = scalar_lea.sflag [#allocation3], 1
    %12 = vsyncpa %s11, 0
    loop: start=0, step=1, limit=4
    $region2: #{_epilogue_pallas.1} parent=1 // loop_pre_header
      _
    $region3: #{_epilogue_pallas.1} parent=1 // loop_header
      %s14 = sphi 0, %s18
      %p15 = scmp.ge.s32.totalorder %s14, 4
      %s21 = sphi 0, %s33
      %s22 = sphi 0, %s29
      %s23 = sphi 0, %s21
      %s24 = sphi 0, %s22
      %s25 = sphi 0, %s23
      %s26 = sphi 0, %s24
      %s38 = sphi 0, %s40
      %s41 = sphi 0, %s38
      %s42 = sphi 0, %s41
      %s58 = sphi 0, %s42
      %s64 = sphi 0, %s66
      %s67 = sphi 0, %s64
      %s68 = sphi 0, %s67
      %s84 = sphi 0, %s68
      %s90 = sphi 0, %s92
      %s93 = sphi 0, %s90
      %s94 = sphi 0, %s93
      %s110 = sphi 0, %s94
      %s118 = sphi 0, %s120
      %s121 = sphi 0, %s118
      %s122 = sphi 0, %s121
      %s138 = sphi 0, %s122
      %s146 = sphi 0, %s148
      %s149 = sphi 0, %s146
      %s150 = sphi 0, %s149
      %s166 = sphi 0, %s150
      %s174 = sphi 0, %s176
      %s177 = sphi 0, %s174
      %s178 = sphi 0, %s177
      %s194 = sphi 0, %s178
    $region4: #{_epilogue_pallas.1} parent=1 // loop_header_branch
      %17 = sbr.rel (%p15) target = $region8
    $region5: #{_epilogue_pallas.1} parent=1 // loop_body
      %s19 = ssub.s32 %s14, 1
      %s20 = ssub.s32 %s14, 2
      %s27 = sadd.s32 1, %s22
      %p28 = scmp.ge.s32.totalorder %s27, 1
      %s29 = scalar_select %p28, 0, %s27
      %s30 = sadd.s32 1, %s21
      %s31 = scalar_select %p28, %s30, %s21
      %p32 = scmp.ge.s32.totalorder %s31, 2
      %s33 = scalar_select %p32, 0, %s31
      %s34 = ssub.s32 %s21, %s33
      %s35 = ssub.s32 %s22, %s29
      %s36 = sor.u32 %s34, %s35
      %p37 = scmp.eq.s32.totalorder %s36, 0
      %s39 = sadd.s32 %s38, 1
      %s40 = scalar_select %p37, %s38, %s39
      %p43 = pneg %p37
      %p44 = scmp.eq.s32.totalorder %s14, 1
      %p45 = por %p43, %p44
      %p46 = scmp.ne.s32.totalorder %s38, %s41
      %p47 = scmp.eq.s32.totalorder %s14, 0
      %p48 = por %p46, %p47
      %p49 = scmp.ne.s32.totalorder %s38, %s41
      %p50 = scmp.eq.s32.totalorder %s19, 1
      %p51 = por %p49, %p50
      %p52 = scmp.ne.s32.totalorder %s41, %s42
      %p53 = scmp.eq.s32.totalorder %s19, 0
      %p54 = por %p52, %p53
      %p55 = scmp.ne.s32.totalorder %s41, %s42
      %p56 = scmp.eq.s32.totalorder %s20, 1
      %p57 = por %p55, %p56
      %p59 = scmp.ne.s32.totalorder %s42, %s58
      %p60 = scmp.eq.s32.totalorder %s20, 0
      %p61 = por %p59, %p60
      %s62 = ssub.s32 %s21, %s33
      %p63 = scmp.eq.s32.totalorder %s62, 0
      %s65 = sadd.s32 %s64, 1
      %s66 = scalar_select %p63, %s64, %s65
      %p69 = pneg %p63
      %p70 = scmp.eq.s32.totalorder %s14, 1
      %p71 = por %p69, %p70
      %p72 = scmp.ne.s32.totalorder %s64, %s67
      %p73 = scmp.eq.s32.totalorder %s14, 0
      %p74 = por %p72, %p73
      %p75 = scmp.ne.s32.totalorder %s64, %s67
      %p76 = scmp.eq.s32.totalorder %s19, 1
      %p77 = por %p75, %p76
      %p78 = scmp.ne.s32.totalorder %s67, %s68
      %p79 = scmp.eq.s32.totalorder %s19, 0
      %p80 = por %p78, %p79
      %p81 = scmp.ne.s32.totalorder %s67, %s68
      %p82 = scmp.eq.s32.totalorder %s20, 1
      %p83 = por %p81, %p82
      %p85 = scmp.ne.s32.totalorder %s68, %s84
      %p86 = scmp.eq.s32.totalorder %s20, 0
      %p87 = por %p85, %p86
      %s88 = ssub.s32 %s22, %s29
      %p89 = scmp.eq.s32.totalorder %s88, 0
      %s91 = sadd.s32 %s90, 1
      %s92 = scalar_select %p89, %s90, %s91
      %p95 = pneg %p89
      %p96 = scmp.eq.s32.totalorder %s14, 1
      %p97 = por %p95, %p96
      %p98 = scmp.ne.s32.totalorder %s90, %s93
      %p99 = scmp.eq.s32.totalorder %s14, 0
      %p100 = por %p98, %p99
      %p101 = scmp.ne.s32.totalorder %s90, %s93
      %p102 = scmp.eq.s32.totalorder %s19, 1
      %p103 = por %p101, %p102
      %p104 = scmp.ne.s32.totalorder %s93, %s94
      %p105 = scmp.eq.s32.totalorder %s19, 0
      %p106 = por %p104, %p105
      %p107 = scmp.ne.s32.totalorder %s93, %s94
      %p108 = scmp.eq.s32.totalorder %s20, 1
      %p109 = por %p107, %p108
      %p111 = scmp.ne.s32.totalorder %s94, %s110
      %p112 = scmp.eq.s32.totalorder %s20, 0
      %p113 = por %p111, %p112
      %s114 = ssub.s32 %s21, %s33
      %s115 = ssub.s32 %s22, %s29
      %s116 = sor.u32 %s114, %s115
      %p117 = scmp.eq.s32.totalorder %s116, 0
      %s119 = sadd.s32 %s118, 1
      %s120 = scalar_select %p117, %s118, %s119
      %p123 = pneg %p117
      %p124 = scmp.eq.s32.totalorder %s14, 1
      %p125 = por %p123, %p124
      %p126 = scmp.ne.s32.totalorder %s118, %s121
      %p127 = scmp.eq.s32.totalorder %s14, 0
      %p128 = por %p126, %p127
      %p129 = scmp.ne.s32.totalorder %s118, %s121
      %p130 = scmp.eq.s32.totalorder %s19, 1
      %p131 = por %p129, %p130
      %p132 = scmp.ne.s32.totalorder %s121, %s122
      %p133 = scmp.eq.s32.totalorder %s19, 0
      %p134 = por %p132, %p133
      %p135 = scmp.ne.s32.totalorder %s121, %s122
      %p136 = scmp.eq.s32.totalorder %s20, 1
      %p137 = por %p135, %p136
      %p139 = scmp.ne.s32.totalorder %s122, %s138
      %p140 = scmp.eq.s32.totalorder %s20, 0
      %p141 = por %p139, %p140
      %s142 = ssub.s32 %s21, %s33
      %s143 = ssub.s32 %s22, %s29
      %s144 = sor.u32 %s142, %s143
      %p145 = scmp.eq.s32.totalorder %s144, 0
      %s147 = sadd.s32 %s146, 1
      %s148 = scalar_select %p145, %s146, %s147
      %p151 = pneg %p145
      %p152 = scmp.eq.s32.totalorder %s14, 1
      %p153 = por %p151, %p152
      %p154 = scmp.ne.s32.totalorder %s146, %s149
      %p155 = scmp.eq.s32.totalorder %s14, 0
      %p156 = por %p154, %p155
      %p157 = scmp.ne.s32.totalorder %s146, %s149
      %p158 = scmp.eq.s32.totalorder %s19, 1
      %p159 = por %p157, %p158
      %p160 = scmp.ne.s32.totalorder %s149, %s150
      %p161 = scmp.eq.s32.totalorder %s19, 0
      %p162 = por %p160, %p161
      %p163 = scmp.ne.s32.totalorder %s149, %s150
      %p164 = scmp.eq.s32.totalorder %s20, 1
      %p165 = por %p163, %p164
      %p167 = scmp.ne.s32.totalorder %s150, %s166
      %p168 = scmp.eq.s32.totalorder %s20, 0
      %p169 = por %p167, %p168
      %s170 = ssub.s32 %s21, %s33
      %s171 = ssub.s32 %s22, %s29
      %s172 = sor.u32 %s170, %s171
      %p173 = scmp.eq.s32.totalorder %s172, 0
      %s175 = sadd.s32 %s174, 1
      %s176 = scalar_select %p173, %s174, %s175
      %p179 = pneg %p173
      %p180 = scmp.eq.s32.totalorder %s14, 1
      %p181 = por %p179, %p180
      %p182 = scmp.ne.s32.totalorder %s174, %s177
      %p183 = scmp.eq.s32.totalorder %s14, 0
      %p184 = por %p182, %p183
      %p185 = scmp.ne.s32.totalorder %s174, %s177
      %p186 = scmp.eq.s32.totalorder %s19, 1
      %p187 = por %p185, %p186
      %p188 = scmp.ne.s32.totalorder %s177, %s178
      %p189 = scmp.eq.s32.totalorder %s19, 0
      %p190 = por %p188, %p189
      %p191 = scmp.ne.s32.totalorder %s177, %s178
      %p192 = scmp.eq.s32.totalorder %s20, 1
      %p193 = por %p191, %p192
      %p195 = scmp.ne.s32.totalorder %s178, %s194
      %p196 = scmp.eq.s32.totalorder %s20, 0
      %p197 = por %p195, %p196
      %p198 = scmp.le.s32.totalorder 1, %s14
      %p199 = scmp.lt.s32.totalorder %s14, 3
      %p200 = pnand %p198, %p199
      %p201 = pneg %p200
      // Predicated region
      $region9: #{_epilogue_pallas.1} parent=5 // pred_check
        _
      $region10: #{_epilogue_pallas.1} parent=5 // pred_check_branch
        %203 = sbr.rel (%p200) target = $region12
      $region11: #{_epilogue_pallas.1} parent=5 // pred_region
        %s204 = ssub.s32 %s14, 1
        // Predicated region
        $region13: #{_epilogue_pallas.1} parent=11 // pred_check
          %p205 = pneg %p106
        $region14: #{_epilogue_pallas.1} parent=11 // pred_check_branch
          %207 = sbr.rel (%p205) target = $region16
        $region15: #{_epilogue_pallas.1} parent=11 // pred_region
          %p208 = scmp.lt.s32.totalorder %s24, 0
          %s209 = scalar_select %p208, %s24, 0
          %s210 = smul.addr %s209, 4
          %s211 = scalar_lea.vmem %s2, %s210
        $region16: #{_epilogue_pallas.1} parent=11 // pred_fallthru
          _
      $region12: #{_epilogue_pallas.1} parent=5 // pred_fallthru
        _
      %p212 = scmp.lt.s32.totalorder %s14, 2
      // Predicated region
      $region17: #{_epilogue_pallas.1} parent=5 // pred_check
        %p213 = pneg %p212
      $region18: #{_epilogue_pallas.1} parent=5 // pred_check_branch
        %215 = sbr.rel (%p213) target = $region20
      $region19: #{_epilogue_pallas.1} parent=5 // pred_region
        // Predicated region
        $region21: #{_epilogue_pallas.1} parent=19 // pred_check
          %p216 = pneg %p48
        $region22: #{_epilogue_pallas.1} parent=19 // pred_check_branch
          %218 = sbr.rel (%p216) target = $region24
        $region23: #{_epilogue_pallas.1} parent=19 // pred_region
          %p219 = scmp.lt.s32.totalorder %s21, 1
          %s220 = scalar_select %p219, %s21, 1
          %p221 = scmp.lt.s32.totalorder %s22, 0
          %s222 = scalar_select %p221, %s22, 0
          %s223 = smul.addr %s222, 2
          %s224 = smul.addr %s220, 2
          %s225 = sadd.s32 %s223, %s224
          %s226 = smul.addr %s225, 4
          %s227 = scalar_lea.vmem %s0, %s226
        $region24: #{_epilogue_pallas.1} parent=19 // pred_fallthru
          _
        // Predicated region
        $region25: #{_epilogue_pallas.1} parent=19 // pred_check
          %p228 = pneg %p74
        $region26: #{_epilogue_pallas.1} parent=19 // pred_check_branch
          %230 = sbr.rel (%p228) target = $region28
        $region27: #{_epilogue_pallas.1} parent=19 // pred_region
          %p231 = scmp.lt.s32.totalorder %s21, 1
          %s232 = scalar_select %p231, %s21, 1
          %s233 = smul.addr %s232, 2
          %s234 = scalar_lea.vmem %s1, %s233
        $region28: #{_epilogue_pallas.1} parent=19 // pred_fallthru
          _
        // Predicated region
        $region29: #{_epilogue_pallas.1} parent=19 // pred_check
          %p235 = pneg %p128
        $region30: #{_epilogue_pallas.1} parent=19 // pred_check_branch
          %237 = sbr.rel (%p235) target = $region32
        $region31: #{_epilogue_pallas.1} parent=19 // pred_region
          %p238 = scmp.lt.s32.totalorder %s21, 1
          %s239 = scalar_select %p238, %s21, 1
          %p240 = scmp.lt.s32.totalorder %s22, 0
          %s241 = scalar_select %p240, %s22, 0
          %s242 = sadd.s32 %s241, %s239
          %s243 = smul.addr %s242, 4
          %s244 = scalar_lea.vmem %s3, %s243
        $region32: #{_epilogue_pallas.1} parent=19 // pred_fallthru
          _
        // Predicated region
        $region33: #{_epilogue_pallas.1} parent=19 // pred_check
          %p245 = pneg %p156
        $region34: #{_epilogue_pallas.1} parent=19 // pred_check_branch
          %247 = sbr.rel (%p245) target = $region36
        $region35: #{_epilogue_pallas.1} parent=19 // pred_region
          %p248 = scmp.lt.s32.totalorder %s21, 1
          %s249 = scalar_select %p248, %s21, 1
          %p250 = scmp.lt.s32.totalorder %s22, 0
          %s251 = scalar_select %p250, %s22, 0
          %s252 = sadd.s32 %s251, %s249
          %s253 = smul.addr %s252, 4
          %s254 = scalar_lea.vmem %s4, %s253
        $region36: #{_epilogue_pallas.1} parent=19 // pred_fallthru
          _
      $region20: #{_epilogue_pallas.1} parent=5 // pred_fallthru
        _
      %p255 = scmp.le.s32.totalorder 1, %s14
      %p256 = scmp.lt.s32.totalorder %s14, 3
      %p257 = pnand %p255, %p256
      %p258 = pneg %p257
      // Predicated region
      $region37: #{_epilogue_pallas.1} parent=5 // pred_check
        _
      $region38: #{_epilogue_pallas.1} parent=5 // pred_check_branch
        %260 = sbr.rel (%p257) target = $region40
      $region39: #{_epilogue_pallas.1} parent=5 // pred_region
        %s261 = ssub.s32 %s14, 1
        %p262 = scmp.lt.s32.totalorder %s23, 1
        %s263 = scalar_select %p262, %s23, 1
        %p264 = scmp.lt.s32.totalorder %s24, 0
        %s265 = scalar_select %p264, %s24, 0
        %s266 = smul.addr %s265, 2
        %s267 = smul.addr %s263, 2
        %s268 = sadd.s32 %s266, %s267
        %s269 = smul.addr %s268, 4
        %s270 = scalar_lea.vmem %s0, %s269
        %p271 = pneg %p54
        %p272 = pneg %p51
        %p273 = scmp.lt.s32.totalorder %s23, 1
        %s274 = scalar_select %p273, %s23, 1
        %s275 = smul.addr %s274, 2
        %s276 = scalar_lea.vmem %s1, %s275
        %p277 = pneg %p80
        %p278 = pneg %p77
        %p279 = scmp.lt.s32.totalorder %s24, 0
        %s280 = scalar_select %p279, %s24, 0
        %s281 = smul.addr %s280, 4
        %s282 = scalar_lea.vmem %s2, %s281
        %p283 = pneg %p106
        %p284 = pneg %p103
        %p285 = scmp.lt.s32.totalorder %s23, 1
        %s286 = scalar_select %p285, %s23, 1
        %p287 = scmp.lt.s32.totalorder %s24, 0
        %s288 = scalar_select %p287, %s24, 0
        %s289 = sadd.s32 %s288, %s286
        %s290 = smul.addr %s289, 4
        %s291 = scalar_lea.vmem %s3, %s290
        %p292 = pneg %p134
        %p293 = pneg %p131
        %p294 = scmp.lt.s32.totalorder %s23, 1
        %s295 = scalar_select %p294, %s23, 1
        %p296 = scmp.lt.s32.totalorder %s24, 0
        %s297 = scalar_select %p296, %s24, 0
        %s298 = sadd.s32 %s297, %s295
        %s299 = smul.addr %s298, 4
        %s300 = scalar_lea.vmem %s4, %s299
        %p301 = pneg %p162
        %p302 = pneg %p159
        %p303 = pneg %p190
        %p304 = pneg %p187
        %s305 = sand.u32 %s177, 1
        %s306 = scalar_lea.sflag [#allocation3], %s305
        %s307 = sand.u32 %s177, 1
        %s308 = smul.addr %s307, 8
        %s309 = scalar_lea.vmem [#allocation2], %s308
        %p310 = scmp.lt.s32.totalorder %s23, 1
        %s311 = scalar_select %p310, %s23, 1
        %p312 = scmp.lt.s32.totalorder %s24, 0
        %s313 = scalar_select %p312, %s24, 0
        %s314 = smul.addr %s313, 2
        %s315 = smul.addr %s311, 2
        %s316 = sadd.s32 %s314, %s315
        %s317 = smul.addr %s316, 4
        %s318 = scalar_lea.vmem %s0, %s317
        %p319 = scmp.lt.s32.totalorder %s23, 1
        %s320 = scalar_select %p319, %s23, 1
        %s321 = smul.addr %s320, 2
        %s322 = scalar_lea.vmem %s1, %s321
        %p323 = scmp.lt.s32.totalorder %s24, 0
        %s324 = scalar_select %p323, %s24, 0
        %s325 = smul.addr %s324, 4
        %s326 = scalar_lea.vmem %s2, %s325
        %p327 = scmp.lt.s32.totalorder %s23, 1
        %s328 = scalar_select %p327, %s23, 1
        %p329 = scmp.lt.s32.totalorder %s24, 0
        %s330 = scalar_select %p329, %s24, 0
        %s331 = sadd.s32 %s330, %s328
        %s332 = smul.addr %s331, 4
        %s333 = scalar_lea.vmem %s3, %s332
        %p334 = scmp.lt.s32.totalorder %s23, 1
        %s335 = scalar_select %p334, %s23, 1
        %p336 = scmp.lt.s32.totalorder %s24, 0
        %s337 = scalar_select %p336, %s24, 0
        %s338 = sadd.s32 %s337, %s335
        %s339 = smul.addr %s338, 4
        %s340 = scalar_lea.vmem %s4, %s339
        %v341 = vld [vmem:[%s318] sm:$0xff]
        %v342 = vld [vmem:[%s322] sm:$0x3]
        %v343 = vld [vmem:[%s326] sm:$0xf]
        %345 = vset.pattern.permute.xlu0 0
        %346 = vperm.xlu0 %345, %v343
        %v347 = vpop.permute.xlu0 %346
        %v350 = vlaneseq
        %v351 = vshrl.u32 %v350, 7
        %v352 = vsub.s32 0, %v351
        %v353 = vrot.slane %v342, %v352
        %v354 = vlaneseq
        %v355 = vshrl.u32 %v354, 7
        %v356 = vsub.s32 1, %v355
        %v357 = vrot.slane %v342, %v356
        %v360 = vmul.f32 %v347, %v353
        %v361 = vmul.f32 %v347, %v357
        %v364 = vcombine.low %v360, %v361
        %v366 = vadd.f32 %v341, %v364
        %vm367 = vcmp.ge.f32.partialorder %v366, 0.0
        %v368 = vmul.f32 %v366, 0.2
        %v369 = vsel %vm367, %v366, %v368
        %v371 = vcombine.high %v369, %v369
        %vm373 = vcmask 1043456
        %v374 = vsel %vm373, %v369, 0.0
        %v375 = vsel %vm373, %v371, 0.0
        %v376 = vadd.f32 %v374, %v375
        %377 = vadd.xlane.f32.xlu0 %v376
        %v378 = vpop.xlane.xlu0 %377
        %v379 = vrcp.pop 256.0
        %v380 = vmul.f32 %v378, %v379
        %v383 = vunpack.c.l.s4 839922192
        %v384 = vunpack.c.0.s8 %v383
        %v385 = vlaneseq
        %v386 = vshrl.u32 %v385, 7
        %v387 = vsub.s32 %v384, %v386
        %v388 = vrot.slane %v380, %v387
        %v390 = vsub.f32 %v369, %v388
        %v391 = vmul.f32 %v390, %v390
        %v393 = vcombine.high %v391, %v391
        %v395 = vsel %vm373, %v391, 0.0
        %v396 = vsel %vm373, %v393, 0.0
        %v397 = vadd.f32 %v395, %v396
        %398 = vadd.xlane.f32.xlu0 %v397
        %v399 = vpop.xlane.xlu0 %398
        %v400 = vmul.f32 %v399, %v379
        %v401 = vadd.f32 %v400, 1e-05
        %v402 = vrsqrt.pop %v401
        %v403 = vld [vmem:[%s333] sm:$0xf]
        %v404 = vld [vmem:[%s340] sm:$0xf]
        %v405 = vadd.f32 %v403, 1.0
        %v406 = vmul.f32 %v405, %v402
        %408 = vset.pattern.permute.xlu0 0
        %409 = vperm.xlu0 %408, %v406
        %v410 = vpop.permute.xlu0 %409
        %v413 = vcombine.high %v390, %v390
        %v415 = vmul.f32 %v410, %v390
        %v416 = vmul.f32 %v410, %v413
        %418 = vset.pattern.permute.xlu0 0
        %419 = vperm.xlu0 %418, %v404
        %v420 = vpop.permute.xlu0 %419
        %v422 = vadd.f32 %v415, %v420
        %v423 = vadd.f32 %v416, %v420
        %v426 = vcombine.low %v422, %v423
        %428 = vst [vmem:[%s309] sm:$0xff] %v426
        %s429 = sand.u32 %s177, 1
        %s430 = scalar_lea.sflag [#allocation3], %s429
        %s431 = sand.u32 %s177, 1
        %s432 = smul.addr %s431, 8
        %s433 = scalar_lea.vmem [#allocation2], %s432
        // Predicated region
        $region41: #{_epilogue_pallas.1} parent=39 // pred_check
          %p434 = pneg %p187
        $region42: #{_epilogue_pallas.1} parent=39 // pred_check_branch
          %436 = sbr.rel (%p434) target = $region44
        $region43: #{_epilogue_pallas.1} parent=39 // pred_region
          %s438 = ssub.s32 128, 128
          %439 = vsyncadd %s430, %s438
          %s440 = smul.addr %s24, 2
          %s441 = smul.addr %s23, 2
          %s442 = sadd.s32 %s440, %s441
          %s443 = smul.addr %s442, 64
          %s444 = scalar_lea.hbm %s5, %s443
          %s446 = sshll.u32 %s433, 4
          %s447 = int_to_ptr.vmem [resolvable:$true] %s446
          %449 = dma.vmem_to_hbm [thread:$0]  %s447, 128, %s444, %s430
        $region44: #{_epilogue_pallas.1} parent=39 // pred_fallthru
          _
      $region40: #{_epilogue_pallas.1} parent=5 // pred_fallthru
        _
      %p450 = scmp.le.s32.totalorder 2, %s14
      // Predicated region
      $region45: #{_epilogue_pallas.1} parent=5 // pred_check
        %p451 = pneg %p450
      $region46: #{_epilogue_pallas.1} parent=5 // pred_check_branch
        %453 = sbr.rel (%p451) target = $region48
      $region47: #{_epilogue_pallas.1} parent=5 // pred_region
        %s454 = ssub.s32 %s14, 2
        // Predicated region
        $region49: #{_epilogue_pallas.1} parent=47 // pred_check
          %p455 = pneg %p193
        $region50: #{_epilogue_pallas.1} parent=47 // pred_check_branch
          %457 = sbr.rel (%p455) target = $region52
        $region51: #{_epilogue_pallas.1} parent=47 // pred_region
          %s458 = sand.u32 %s178, 1
          %s459 = scalar_lea.sflag [#allocation3], %s458
          %s460 = sand.u32 %s178, 1
          %s461 = smul.addr %s460, 8
          %s462 = scalar_lea.vmem [#allocation2], %s461
          %463 = dma.done %s459, 128
        $region52: #{_epilogue_pallas.1} parent=47 // pred_fallthru
          _
      $region48: #{_epilogue_pallas.1} parent=5 // pred_fallthru
        _
    $region6: #{_epilogue_pallas.1} parent=1 // loop_footer
      %s18 = sadd.s32 1, %s14
    $region7: #{_epilogue_pallas.1} parent=1 // loop_footer_branch
      %13 = sbr.rel target = $region3
    $region8: #{_epilogue_pallas.1} parent=1 // loop_exit
      _
    %464 = vsyncpa [#allocation3], 1
    %s465 = scalar_lea.sflag [#allocation3], 1
    %466 = vsyncpa %s465, 1

</llo_original>
